<compile_context>
chip_gen: v7x
topology: tpu7x:2x2x1
jax: 0.10.0
libtpu: 0.0.40
codegen_flags: <defaults>
</compile_context>

<pallas_src>
import numpy as np

import jax
import jax.numpy as jnp
from jax.experimental import pallas as pl
from jax.experimental.pallas import tpu as pltpu

KSIZE = 7
PAD = KSIZE // 2


# ---------------------------------------------------------------------------
# Host-side band-matrix construction (vectorized + memoized).
# ---------------------------------------------------------------------------
_BAND_CACHE = {}


def _band_matrix_np(w2d, H, W, C):
    """(2,7,7) conv weight -> (2*HW, HW) f32 stacked band matrix.

    Rows [0:HW] act on the flattened channel-SUM map (mean's 1/C folded in),
    rows [HW:2*HW] on the channel-MAX map:
        conv_out[n].ravel() = concat([sum_map, max_map])[n] @ band
    'same' zero padding is encoded by simply omitting out-of-bounds taps.
    """
    HW = H * W
    band = np.zeros((2, HW, HW), dtype=np.float32)
    hh, ww = np.meshgrid(np.arange(H), np.arange(W), indexing="ij")
    out_idx = (hh * W + ww).ravel()                      # output position o = h*W + w
    for ki in range(KSIZE):
        dh = ki - PAD
        for kj in range(KSIZE):
            dw = kj - PAD
            qh, qw = hh + dh, ww + dw                    # source position per output
            valid = ((qh >= 0) & (qh < H) & (qw >= 0) & (qw < W)).ravel()
            src_idx = (np.clip(qh, 0, H - 1) * W + np.clip(qw, 0, W - 1)).ravel()
            band[0, src_idx[valid], out_idx[valid]] = w2d[0, ki, kj]
            band[1, src_idx[valid], out_idx[valid]] = w2d[1, ki, kj]
    band[0] *= np.float32(1.0 / C)                       # fold the mean's 1/C
    return band.reshape(2 * HW, HW)


def build_band_matrix(weight, H, W, C):
    """Memoized (2*HW, HW) bf16 band matrix for a concrete (1,2,7,7) weight.

    NOTE: requires a concrete (host) weight -- call outside jax.jit.
    """
    w_np = np.asarray(weight, dtype=np.float32).reshape(2, KSIZE, KSIZE)
    key = (w_np.tobytes(), H, W, C)
    if key not in _BAND_CACHE:
        _BAND_CACHE[key] = jnp.asarray(
            _band_matrix_np(w_np, H, W, C), dtype=jnp.bfloat16)
    return _BAND_CACHE[key]


# ---------------------------------------------------------------------------
# Generation-aware sizing.
# ---------------------------------------------------------------------------
def _chip_info():
    """Best-effort (physical_vmem_bytes, tensorcores_per_chip, max_block_batch)."""
    kind = ""
    try:
        kind = jax.devices()[0].device_kind.lower()
    except Exception:
        pass
    vmem = None
    try:
        vmem = int(pltpu.get_tpu_info().vmem_capacity_bytes)
    except Exception:
        pass
    if "v7" in kind:
        return (vmem or 64 * 2**20), 2, 256
    if "v5 lite" in kind or "v5e" in kind or "v5litepod" in kind:
        # v5e: 128 MiB VMEM, 1 TC, 128x128 MXU passes -> M=128 already fills one.
        return (vmem or 128 * 2**20), 1, 128
    if "v6" in kind:
        return (vmem or 128 * 2**20), 1, 256
    return (vmem or 64 * 2**20), 1, 128                  # unknown: conservative


def _largest_divisor_le(n, target):
    target = max(1, min(int(target), n))
    for d in range(target, 0, -1):
        if n % d == 0:
            return d
    return 1


def _pick_block_batch(N, C, HW, *, vmem_bytes, num_cores, max_nb):
    """Images per grid step from an explicit VMEM budget.

    Accounts for: double-buffered f32 input block (Nb*C*HW*4), double-buffered
    f32 output block (Nb*HW*4), single-buffered bf16 band (2*HW*HW*2).  The
    batch is only split across grid steps on multi-TC chips (v7x), and only
    when each core still gets >= 8 images (full-sublane output tiles).
    """
    band_bytes = (2 * HW) * HW * 2
    per_img = 2 * (C * HW * 4 + HW * 4)
    budget = int(vmem_bytes * 0.75) - band_bytes
    cap = max(1, budget // per_img) if budget > per_img else 1
    target = min(cap, max_nb, N)
    if num_cores > 1 and N >= 16 * num_cores:
        target = min(target, N // num_cores)
    return _largest_divisor_le(N, target)


# ---------------------------------------------------------------------------
# Kernel.
# ---------------------------------------------------------------------------
def _kernel(x_ref, band_ref, b_ref, o_ref):
    # Fused channel mean/max: one full-tile read, cross-sublane (XLU) reduces.
    x = x_ref[...]                                        # (Nb, C, HW) f32
    s = jnp.sum(x, axis=1)                                # (Nb, HW)  (1/C is in band)
    m = jnp.max(x, axis=1)                                # (Nb, HW)
    # 7x7 'same' conv (2 -> 1 ch) as a single bf16 MXU matmul, f32 accumulate.
    a = jnp.concatenate([s, m], axis=-1).astype(jnp.bfloat16)        # (Nb, 2*HW)
    y = jnp.dot(a, band_ref[...], preferred_element_type=jnp.float32)  # (Nb, HW)
    # Bias (SMEM scalar) + sigmoid, lane-dense full-tile store.
    o_ref[...] = jax.nn.sigmoid(y + b_ref[0])


def _run_pallas(x_flat, band, bias, *, N, C, HW, Nb, vmem_limit,
                single_buffer_band):
    if single_buffer_band:
        # Constant index_map -> the band never changes; one resident copy is
        # enough (halves its VMEM footprint vs. the default double buffer).
        band_spec = pl.BlockSpec((2 * HW, HW), lambda n: (0, 0),
                                 pipeline_mode=pl.Buffered(1))
    else:
        band_spec = pl.BlockSpec((2 * HW, HW), lambda n: (0, 0))
    return pl.pallas_call(
        _kernel,
        out_shape=jax.ShapeDtypeStruct((N, HW), jnp.float32),
        grid=(N // Nb,),
        in_specs=[
            pl.BlockSpec((Nb, C, HW), lambda n: (n, 0, 0)),   # lane-dense input
            band_spec,                                        # resident band
            pl.BlockSpec(memory_space=pltpu.MemorySpace.SMEM),  # conv bias scalar
        ],
        out_specs=pl.BlockSpec((Nb, HW), lambda n: (n, 0)),   # 2-D, lane-dense
        compiler_params=pltpu.CompilerParams(
            dimension_semantics=("parallel",),
            vmem_limit_bytes=vmem_limit),
    )(x_flat, band, bias)


def spatial_attention(x, weight, bias):
    """x: (N, C, H, W) f32; weight: (1, 2, 7, 7); bias: (1,). -> (N, 1, H, W)."""
    N, C, H, W = x.shape
    HW = H * W

    x_flat = jnp.asarray(x, jnp.float32).reshape(N, C, HW)   # free XLA reshape
    band = build_band_matrix(weight, H, W, C)                # (2*HW, HW) bf16
    bias = jnp.asarray(bias, jnp.float32).reshape(1)

    phys_vmem, num_cores, max_nb = _chip_info()
    Nb = _pick_block_batch(N, C, HW, vmem_bytes=phys_vmem,
                           num_cores=num_cores, max_nb=max_nb)

    # Honest VMEM accounting: double-buffered in/out blocks + single-buffered
    # bf16 band + headroom for compiler scratch.
    vmem_need = 2 * (Nb * C * HW * 4 + Nb * HW * 4) + (2 * HW) * HW * 2
    vmem_limit = int(min(phys_vmem, max(32 << 20, vmem_need + (8 << 20))))

    try:
        out_flat = _run_pallas(x_flat, band, bias, N=N, C=C, HW=HW, Nb=Nb,
                               vmem_limit=vmem_limit, single_buffer_band=True)
    except Exception:
        # Some Pallas versions reject pipeline_mode on the outer pallas_call;
        # fall back to the default (double-buffered) band, which is still tiny
        # in bf16 at these spatial sizes.
        out_flat = _run_pallas(x_flat, band, bias, N=N, C=C, HW=HW, Nb=Nb,
                               vmem_limit=vmem_limit, single_buffer_band=False)

    return out_flat.reshape(N, 1, H, W)


# ---------------------------------------------------------------------------
# Plain-JAX reference (exact PyTorch semantics) and demo.
# ---------------------------------------------------------------------------
def reference(x, weight, bias):
    avg = jnp.mean(x, axis=1, keepdims=True)
    mx = jnp.max(x, axis=1, keepdims=True)
    cat = jnp.concatenate([avg, mx], axis=1)                  # (N, 2, H, W)
    out = jax.lax.conv_general_dilated(
        cat, weight, window_strides=(1, 1),
        padding=[(PAD, PAD), (PAD, PAD)],
        dimension_numbers=("NCHW", "OIHW", "NCHW"))
    return jax.nn.sigmoid(out + bias.reshape(1, 1, 1, 1))


if __name__ == "__main__":
    key = jax.random.PRNGKey(0)
    kx, kw, kb = jax.random.split(key, 3)

    N, C, H, W = 2, 4, 16, 16
    x = jax.random.normal(kx, (N, C, H, W), dtype=jnp.float32)

    # Deterministic synthetic parameters (Conv2d(2, 1, kernel_size=7) shapes).
    fan_in = 2 * KSIZE * KSIZE
    bound = 1.0 / np.sqrt(fan_in)
    weight = jax.random.uniform(kw, (1, 2, KSIZE, KSIZE),
                                minval=-bound, maxval=bound, dtype=jnp.float32)
    bias = jax.random.uniform(kb, (1,), minval=-bound, maxval=bound,
                              dtype=jnp.float32)

    out = spatial_attention(x, weight, bias)
    out = jax.block_until_ready(out)
    assert out.shape == (N, 1, H, W)

    ref = reference(x, weight, bias)
    # bf16 band / matmul LHS (per the perf review) plus a different reduction
    # order than lax.conv: compare post-sigmoid with a tolerance that still
    # catches any real tap/index/weight bug (those show up at O(0.1)).
    np.testing.assert_allclose(np.asarray(out), np.asarray(ref),
                               rtol=0.0, atol=5e-3)
    print("KERNEL_OK")
</pallas_src>

<mosaic_0001>
module attributes {stable_mosaic.version = 11 : i64} {
  func.func @_kernel(%arg0: i32, %arg1: memref<2x4x256xf32, #tpu.memory_space<vmem>>, %arg2: memref<512x256xbf16, #tpu.memory_space<vmem>>, %arg3: memref<1xf32, #tpu.memory_space<smem>>, %arg4: memref<2x256xf32, #tpu.memory_space<vmem>>) attributes {dimension_semantics = [#tpu.dimension_semantics<parallel>], iteration_bounds = array<i64: 1>, scalar_prefetch = 0 : i64, scratch_operands = 0 : i64, tpu.core_type = #tpu.core_type<tc>, window_params = [{transform_indices = @transform_0, window_bounds = array<i64: 2, 4, 256>}, {pipeline_mode = #tpu.pipeline_mode<synchronous>, transform_indices = @transform_1, window_bounds = array<i64: 512, 256>}, {transform_indices = @transform_2, window_bounds = array<i64: 1>}, {transform_indices = @transform_3, window_bounds = array<i64: 2, 256>}]} {
    %c0 = arith.constant 0 : index
    %c0_0 = arith.constant 0 : index
    %c0_1 = arith.constant 0 : index
    %0 = vector.load %arg1[%c0, %c0_0, %c0_1] : memref<2x4x256xf32, #tpu.memory_space<vmem>>, vector<2x4x256xf32>
    %cst = arith.constant dense<0.000000e+00> : vector<2x256xf32>
    %1 = vector.multi_reduction <add>, %0, %cst [1] : vector<2x4x256xf32> to vector<2x256xf32>
    %cst_2 = arith.constant dense<0xFF800000> : vector<2x256xf32>
    %2 = vector.multi_reduction <maximumf>, %0, %cst_2 [1] : vector<2x4x256xf32> to vector<2x256xf32>
    %3 = tpu.concatenate %1, %2 in 1 : vector<2x256xf32>, vector<2x256xf32> -> vector<2x512xf32>
    %4 = arith.truncf %3 : vector<2x512xf32> to vector<2x512xbf16>
    %c0_3 = arith.constant 0 : index
    %c0_4 = arith.constant 0 : index
    %5 = vector.load %arg2[%c0_3, %c0_4] : memref<512x256xbf16, #tpu.memory_space<vmem>>, vector<512x256xbf16>
    %cst_5 = arith.constant dense<0.000000e+00> : vector<2x256xf32>
    %6 = tpu.matmul %4, %5, %cst_5 {dimension_numbers = #tpu.dot_dimension_numbers<[1], [0], [0], [1], [0, 0, 1, 1], [], []>} : vector<2x512xbf16>, vector<512x256xbf16>, vector<2x256xf32> -> vector<2x256xf32>
    %c0_6 = arith.constant 0 : index
    %7 = memref.load %arg3[%c0_6] : memref<1xf32, #tpu.memory_space<smem>>
    %8 = vector.broadcast %7 : f32 to vector<2x256xf32>
    %9 = arith.addf %6, %8 : vector<2x256xf32>
    %10 = arith.negf %9 : vector<2x256xf32>
    %11 = math.exp %10 : vector<2x256xf32>
    %cst_7 = arith.constant 1.000000e+00 : f32
    %12 = vector.broadcast %cst_7 : f32 to vector<2x256xf32>
    %13 = arith.addf %12, %11 : vector<2x256xf32>
    %14 = arith.divf %12, %13 : vector<2x256xf32>
    %c0_8 = arith.constant 0 : index
    %c0_9 = arith.constant 0 : index
    %15 = vector.load %arg4[%c0_8, %c0_9] : memref<2x256xf32, #tpu.memory_space<vmem>>, vector<2x256xf32>
    tpu.vector_store %arg4[%c0_8, %c0_9], %14 {strides = array<i32>} : memref<2x256xf32, #tpu.memory_space<vmem>>, vector<2x256xf32>,
    return
  }
  func.func @transform_0(%arg0: i32) -> (i32, i32, i32) {
    %c0_i32 = arith.constant 0 : i32
    %c0_i32_0 = arith.constant 0 : i32
    %c0_i32_1 = arith.constant 0 : i32
    return %arg0, %c0_i32, %c0_i32_0 : i32, i32, i32
  }
  func.func @transform_1(%arg0: i32) -> (i32, i32) {
    %c0_i32 = arith.constant 0 : i32
    %c0_i32_0 = arith.constant 0 : i32
    %c0_i32_1 = arith.constant 0 : i32
    return %c0_i32, %c0_i32_0 : i32, i32
  }
  func.func @transform_2(%arg0: i32) -> i32 {
    %c0_i32 = arith.constant 0 : i32
    %c0_i32_0 = arith.constant 0 : i32
    return %c0_i32 : i32
  }
  func.func @transform_3(%arg0: i32) -> (i32, i32) {
    %c0_i32 = arith.constant 0 : i32
    %c0_i32_0 = arith.constant 0 : i32
    return %arg0, %c0_i32 : i32, i32
  }
}

module attributes {stable_mosaic.version = 11 : i64} {
  func.func @_kernel(%arg0: i32, %arg1: memref<2x4x256xf32, #tpu.memory_space<vmem>>, %arg2: memref<512x256xbf16, #tpu.memory_space<vmem>>, %arg3: memref<1xf32, #tpu.memory_space<smem>>, %arg4: memref<2x256xf32, #tpu.memory_space<vmem>>) attributes {dimension_semantics = [#tpu.dimension_semantics<parallel>], iteration_bounds = array<i64: 1>, scalar_prefetch = 0 : i64, scratch_operands = 0 : i64, tpu.core_type = #tpu.core_type<tc>, window_params = [{transform_indices = @transform_0, window_bounds = array<i64: 2, 4, 256>}, {pipeline_mode = #tpu.pipeline_mode<synchronous>, transform_indices = @transform_1, window_bounds = array<i64: 512, 256>}, {transform_indices = @transform_2, window_bounds = array<i64: 1>}, {transform_indices = @transform_3, window_bounds = array<i64: 2, 256>}]} {
    %c0 = arith.constant 0 : index
    %c0_0 = arith.constant 0 : index
    %c0_1 = arith.constant 0 : index
    %0 = vector.load %arg1[%c0, %c0_0, %c0_1] : memref<2x4x256xf32, #tpu.memory_space<vmem>>, vector<2x4x256xf32>
    %cst = arith.constant dense<0.000000e+00> : vector<2x256xf32>
    %1 = vector.multi_reduction <add>, %0, %cst [1] : vector<2x4x256xf32> to vector<2x256xf32>
    %cst_2 = arith.constant dense<0xFF800000> : vector<2x256xf32>
    %2 = vector.multi_reduction <maximumf>, %0, %cst_2 [1] : vector<2x4x256xf32> to vector<2x256xf32>
    %3 = tpu.concatenate %1, %2 in 1 : vector<2x256xf32>, vector<2x256xf32> -> vector<2x512xf32>
    %4 = arith.truncf %3 : vector<2x512xf32> to vector<2x512xbf16>
    %c0_3 = arith.constant 0 : index
    %c0_4 = arith.constant 0 : index
    %5 = vector.load %arg2[%c0_3, %c0_4] : memref<512x256xbf16, #tpu.memory_space<vmem>>, vector<512x256xbf16>
    %cst_5 = arith.constant dense<0.000000e+00> : vector<2x256xf32>
    %6 = tpu.matmul %4, %5, %cst_5 {dimension_numbers = #tpu.dot_dimension_numbers<[1], [0], [0], [1], [0, 0, 1, 1], [], []>} : vector<2x512xbf16>, vector<512x256xbf16>, vector<2x256xf32> -> vector<2x256xf32>
    %c0_6 = arith.constant 0 : index
    %7 = memref.load %arg3[%c0_6] : memref<1xf32, #tpu.memory_space<smem>>
    %8 = vector.broadcast %7 : f32 to vector<2x256xf32>
    %9 = arith.addf %6, %8 : vector<2x256xf32>
    %10 = arith.negf %9 : vector<2x256xf32>
    %11 = math.exp %10 : vector<2x256xf32>
    %cst_7 = arith.constant 1.000000e+00 : f32
    %12 = vector.broadcast %cst_7 : f32 to vector<2x256xf32>
    %13 = arith.addf %12, %11 : vector<2x256xf32>
    %14 = arith.divf %12, %13 : vector<2x256xf32>
    %c0_8 = arith.constant 0 : index
    %c0_9 = arith.constant 0 : index
    %15 = vector.load %arg4[%c0_8, %c0_9] : memref<2x256xf32, #tpu.memory_space<vmem>>, vector<2x256xf32>
    tpu.vector_store %arg4[%c0_8, %c0_9], %14 {strides = array<i32>} : memref<2x256xf32, #tpu.memory_space<vmem>>, vector<2x256xf32>,
    return
  }
  func.func @transform_0(%arg0: i32) -> (i32, i32, i32) {
    %c0_i32 = arith.constant 0 : i32
    %c0_i32_0 = arith.constant 0 : i32
    %c0_i32_1 = arith.constant 0 : i32
    return %arg0, %c0_i32, %c0_i32_0 : i32, i32, i32
  }
  func.func @transform_1(%arg0: i32) -> (i32, i32) {
    %c0_i32 = arith.constant 0 : i32
    %c0_i32_0 = arith.constant 0 : i32
    %c0_i32_1 = arith.constant 0 : i32
    return %c0_i32, %c0_i32_0 : i32, i32
  }
  func.func @transform_2(%arg0: i32) -> i32 {
    %c0_i32 = arith.constant 0 : i32
    %c0_i32_0 = arith.constant 0 : i32
    return %c0_i32 : i32
  }
  func.func @transform_3(%arg0: i32) -> (i32, i32) {
    %c0_i32 = arith.constant 0 : i32
    %c0_i32_0 = arith.constant 0 : i32
    return %arg0, %c0_i32 : i32, i32
  }
}

</mosaic_0001>

<llo_original>
// kernel: tpu_custom_call.1
$region0: #{tpu_custom_call.1}
  #allocation0 [shape = 'u32[]', space=smem, size = 0x4, offset = 0x4, fixed_abs, tag = 'smem constant byte address 0x4 - core index']
  #allocation1 [shape = 'u32[144,128]{1,0:T(1,128)}', space=vmem, size = 0x12000, scoped, tag = 'internal scratch']
  #allocation2 [shape = 'f32[1]{0:T(128)S(6)}', space=smem, size = 0x200, scoped, tag = 'scoped memory for tpu_custom_call.1']
  %s0 = inlined_call_operand.hbm [shape: f32[2,4,256], index: 0, kind: input, shape index: {}]
  %s1 = inlined_call_operand.hbm [shape: bf16[512,256], index: 1, kind: input, shape index: {}]
  %s2 = inlined_call_operand.<no memory space> [shape: f32[1], index: 2, kind: input, shape index: {}]
  %s3 = inlined_call_operand.hbm [shape: f32[2,256], index: 3, kind: output, shape index: {}]
  %s4 = sld [smem:[#allocation0]]
  $region30: #{tpu_custom_call.1} parent=0
    _
  %s6 = ssub.s32 1, %s4
  %s7 = scalar_select 0, %s6, %s4
  %8 = sst [smem:[#allocation2]] %s2
  $region1: #{tpu_custom_call.1} parent=0
    #allocation3 [shape = 'u8[8192]{0}', space=vmem, size = 0x2000, scoped, tag = 'input window, operand 0, single buffered']
    #allocation4 [shape = 's32[1]{0}', space=sflag, size = 0x4, scoped, tag = 'scoped memory for tpu_custom_call.1']
    #allocation5 [shape = 's32[1]{0}', space=sflag, size = 0x4, scoped, tag = 'scoped memory for tpu_custom_call.1']
    #allocation6 [shape = 'u8[262144]{0}', space=vmem, size = 0x40000, scoped, tag = 'input window, operand 1, single buffered']
    #allocation7 [shape = 's32[1]{0}', space=sflag, size = 0x4, scoped, tag = 'scoped memory for tpu_custom_call.1']
    #allocation8 [shape = 'u8[2048]{0}', space=vmem, size = 0x800, scoped, tag = 'output window, operand 0, single buffered']
    %9 = vsyncpa [#allocation4], 0
    %10 = vsyncpa [#allocation7], 0
    %11 = vsyncpa [#allocation5], 0
    // Predicated region
    $region2: #{tpu_custom_call.1} parent=1 // pred_check
      _
    $region3: #{tpu_custom_call.1} parent=1 // pred_check_branch
      %13 = sbr.rel (0) target = $region5
    $region4: #{tpu_custom_call.1} parent=1 // pred_region
      %s15 = ssub.s32 256, 256
      %16 = vsyncadd [#allocation4], %s15
      %s17 = sshll.u32 [#allocation3], 4
      %s18 = int_to_ptr.vmem [resolvable:$true] %s17
      %23 = dma.hbm_to_vmem [thread:$0]  %s0, 256, %s18, [#allocation4], 128, 128, 8
    $region5: #{tpu_custom_call.1} parent=1 // pred_fallthru
      _
    // Predicated region
    $region6: #{tpu_custom_call.1} parent=1 // pred_check
      _
    $region7: #{tpu_custom_call.1} parent=1 // pred_check_branch
      %25 = sbr.rel (0) target = $region9
    $region8: #{tpu_custom_call.1} parent=1 // pred_region
      %s27 = ssub.s32 8192, 8192
      %28 = vsyncadd [#allocation7], %s27
      %s29 = sshll.u32 [#allocation6], 4
      %s30 = int_to_ptr.vmem [resolvable:$true] %s29
      %35 = dma.hbm_to_vmem [thread:$0]  %s1, 8192, %s30, [#allocation7], 128, 128, 8
    $region9: #{tpu_custom_call.1} parent=1 // pred_fallthru
      _
    // Predicated region
    $region10: #{tpu_custom_call.1} parent=1 // pred_check
      _
    $region11: #{tpu_custom_call.1} parent=1 // pred_check_branch
      %37 = sbr.rel (0) target = $region13
    $region12: #{tpu_custom_call.1} parent=1 // pred_region
      _
    $region13: #{tpu_custom_call.1} parent=1 // pred_fallthru
      _
    // Predicated region
    $region14: #{tpu_custom_call.1} parent=1 // pred_check
      _
    $region15: #{tpu_custom_call.1} parent=1 // pred_check_branch
      %39 = sbr.rel (0) target = $region17
    $region16: #{tpu_custom_call.1} parent=1 // pred_region
      %40 = dma.done [#allocation4], 256
    $region17: #{tpu_custom_call.1} parent=1 // pred_fallthru
      _
    // Predicated region
    $region18: #{tpu_custom_call.1} parent=1 // pred_check
      _
    $region19: #{tpu_custom_call.1} parent=1 // pred_check_branch
      %42 = sbr.rel (0) target = $region21
    $region20: #{tpu_custom_call.1} parent=1 // pred_region
      %43 = dma.done [#allocation7], 8192
    $region21: #{tpu_custom_call.1} parent=1 // pred_fallthru
      _
    %v44 = vld [vmem:[#allocation3] sm:$0xff]
    %v45 = vld [vmem:[#allocation3 + $0x8] sm:$0xff]
    %v48 = vcombine.high %v44, %v44
    %v49 = vcombine.high %v45, %v45
    %vm52 = vcmask 1043456
    %v53 = vsel %vm52, %v44, 0.0
    %v54 = vrot.slane %v53, 4
    %v55 = vadd.f32 %v53, %v54
    %v56 = vrot.slane %v55, 2
    %v57 = vadd.f32 %v55, %v56
    %v58 = vrot.slane %v57, 1
    %v59 = vadd.f32 %v57, %v58
    %v60 = vsel %vm52, %v48, 0.0
    %v61 = vrot.slane %v60, 4
    %v62 = vadd.f32 %v60, %v61
    %v63 = vrot.slane %v62, 2
    %v64 = vadd.f32 %v62, %v63
    %v65 = vrot.slane %v64, 1
    %v66 = vadd.f32 %v64, %v65
    %v67 = vsel %vm52, %v45, 0.0
    %v68 = vrot.slane %v67, 4
    %v69 = vadd.f32 %v67, %v68
    %v70 = vrot.slane %v69, 2
    %v71 = vadd.f32 %v69, %v70
    %v72 = vrot.slane %v71, 1
    %v73 = vadd.f32 %v71, %v72
    %v74 = vsel %vm52, %v49, 0.0
    %v75 = vrot.slane %v74, 4
    %v76 = vadd.f32 %v74, %v75
    %v77 = vrot.slane %v76, 2
    %v78 = vadd.f32 %v76, %v77
    %v79 = vrot.slane %v78, 1
    %v80 = vadd.f32 %v78, %v79
    %v81 = vsel %vm52, %v44, -inf
    %v82 = vrot.slane %v81, 4
    %v83 = vmax.f32 %v81, %v82
    %v84 = vrot.slane %v83, 2
    %v85 = vmax.f32 %v83, %v84
    %v86 = vrot.slane %v85, 1
    %v87 = vmax.f32 %v85, %v86
    %v88 = vsel %vm52, %v48, -inf
    %v89 = vrot.slane %v88, 4
    %v90 = vmax.f32 %v88, %v89
    %v91 = vrot.slane %v90, 2
    %v92 = vmax.f32 %v90, %v91
    %v93 = vrot.slane %v92, 1
    %v94 = vmax.f32 %v92, %v93
    %v95 = vsel %vm52, %v45, -inf
    %v96 = vrot.slane %v95, 4
    %v97 = vmax.f32 %v95, %v96
    %v98 = vrot.slane %v97, 2
    %v99 = vmax.f32 %v97, %v98
    %v100 = vrot.slane %v99, 1
    %v101 = vmax.f32 %v99, %v100
    %v102 = vsel %vm52, %v49, -inf
    %v103 = vrot.slane %v102, 4
    %v104 = vmax.f32 %v102, %v103
    %v105 = vrot.slane %v104, 2
    %v106 = vmax.f32 %v104, %v105
    %v107 = vrot.slane %v106, 1
    %v108 = vmax.f32 %v106, %v107
    %vm113 = vcmask 1041409
    %v114 = vsel %vm113, %v73, %v59
    %v115 = vsel %vm113, %v80, %v66
    %v122 = vsel %vm113, %v101, %v87
    %v123 = vsel %vm113, %v108, %v94
    %v126 = vpack.c.bf16 %v114, %v114
    %v127 = vpack.c.bf16 %v115, %v115
    %v128 = vpack.c.bf16 %v122, %v122
    %v129 = vpack.c.bf16 %v123, %v123
    %v130 = vld [vmem:[#allocation6] sm:$0xff]
    %v131 = vld [vmem:[#allocation6 + $0x8] sm:$0xff]
    %v132 = vld [vmem:[#allocation6 + $0x10] sm:$0xff]
    %v133 = vld [vmem:[#allocation6 + $0x18] sm:$0xff]
    %v134 = vld [vmem:[#allocation6 + $0x20] sm:$0xff]
    %v135 = vld [vmem:[#allocation6 + $0x28] sm:$0xff]
    %v136 = vld [vmem:[#allocation6 + $0x30] sm:$0xff]
    %v137 = vld [vmem:[#allocation6 + $0x38] sm:$0xff]
    %v138 = vld [vmem:[#allocation6 + $0x40] sm:$0xff]
    %v139 = vld [vmem:[#allocation6 + $0x48] sm:$0xff]
    %v140 = vld [vmem:[#allocation6 + $0x50] sm:$0xff]
    %v141 = vld [vmem:[#allocation6 + $0x58] sm:$0xff]
    %v142 = vld [vmem:[#allocation6 + $0x60] sm:$0xff]
    %v143 = vld [vmem:[#allocation6 + $0x68] sm:$0xff]
    %v144 = vld [vmem:[#allocation6 + $0x70] sm:$0xff]
    %v145 = vld [vmem:[#allocation6 + $0x78] sm:$0xff]
    %v146 = vld [vmem:[#allocation6 + $0x80] sm:$0xff]
    %v147 = vld [vmem:[#allocation6 + $0x88] sm:$0xff]
    %v148 = vld [vmem:[#allocation6 + $0x90] sm:$0xff]
    %v149 = vld [vmem:[#allocation6 + $0x98] sm:$0xff]
    %v150 = vld [vmem:[#allocation6 + $0xa0] sm:$0xff]
    %v151 = vld [vmem:[#allocation6 + $0xa8] sm:$0xff]
    %v152 = vld [vmem:[#allocation6 + $0xb0] sm:$0xff]
    %v153 = vld [vmem:[#allocation6 + $0xb8] sm:$0xff]
    %v154 = vld [vmem:[#allocation6 + $0xc0] sm:$0xff]
    %v155 = vld [vmem:[#allocation6 + $0xc8] sm:$0xff]
    %v156 = vld [vmem:[#allocation6 + $0xd0] sm:$0xff]
    %v157 = vld [vmem:[#allocation6 + $0xd8] sm:$0xff]
    %v158 = vld [vmem:[#allocation6 + $0xe0] sm:$0xff]
    %v159 = vld [vmem:[#allocation6 + $0xe8] sm:$0xff]
    %v160 = vld [vmem:[#allocation6 + $0xf0] sm:$0xff]
    %v161 = vld [vmem:[#allocation6 + $0xf8] sm:$0xff]
    %v162 = vld [vmem:[#allocation6 + $0x100] sm:$0xff]
    %v163 = vld [vmem:[#allocation6 + $0x108] sm:$0xff]
    %v164 = vld [vmem:[#allocation6 + $0x110] sm:$0xff]
    %v165 = vld [vmem:[#allocation6 + $0x118] sm:$0xff]
    %v166 = vld [vmem:[#allocation6 + $0x120] sm:$0xff]
    %v167 = vld [vmem:[#allocation6 + $0x128] sm:$0xff]
    %v168 = vld [vmem:[#allocation6 + $0x130] sm:$0xff]
    %v169 = vld [vmem:[#allocation6 + $0x138] sm:$0xff]
    %v170 = vld [vmem:[#allocation6 + $0x140] sm:$0xff]
    %v171 = vld [vmem:[#allocation6 + $0x148] sm:$0xff]
    %v172 = vld [vmem:[#allocation6 + $0x150] sm:$0xff]
    %v173 = vld [vmem:[#allocation6 + $0x158] sm:$0xff]
    %v174 = vld [vmem:[#allocation6 + $0x160] sm:$0xff]
    %v175 = vld [vmem:[#allocation6 + $0x168] sm:$0xff]
    %v176 = vld [vmem:[#allocation6 + $0x170] sm:$0xff]
    %v177 = vld [vmem:[#allocation6 + $0x178] sm:$0xff]
    %v178 = vld [vmem:[#allocation6 + $0x180] sm:$0xff]
    %v179 = vld [vmem:[#allocation6 + $0x188] sm:$0xff]
    %v180 = vld [vmem:[#allocation6 + $0x190] sm:$0xff]
    %v181 = vld [vmem:[#allocation6 + $0x198] sm:$0xff]
    %v182 = vld [vmem:[#allocation6 + $0x1a0] sm:$0xff]
    %v183 = vld [vmem:[#allocation6 + $0x1a8] sm:$0xff]
    %v184 = vld [vmem:[#allocation6 + $0x1b0] sm:$0xff]
    %v185 = vld [vmem:[#allocation6 + $0x1b8] sm:$0xff]
    %v186 = vld [vmem:[#allocation6 + $0x1c0] sm:$0xff]
    %v187 = vld [vmem:[#allocation6 + $0x1c8] sm:$0xff]
    %v188 = vld [vmem:[#allocation6 + $0x1d0] sm:$0xff]
    %v189 = vld [vmem:[#allocation6 + $0x1d8] sm:$0xff]
    %v190 = vld [vmem:[#allocation6 + $0x1e0] sm:$0xff]
    %v191 = vld [vmem:[#allocation6 + $0x1e8] sm:$0xff]
    %v192 = vld [vmem:[#allocation6 + $0x1f0] sm:$0xff]
    %v193 = vld [vmem:[#allocation6 + $0x1f8] sm:$0xff]
    %s194 = sld [smem:[#allocation2]]
    %v195 = vstv %s194
    %v260 = vunpack.c.l.b16 %v130
    %v261 = vunpack.c.h.b16 %v130
    %v262 = vunpack.c.l.b16 %v131
    %v263 = vunpack.c.h.b16 %v131
    %v264 = vunpack.c.l.b16 %v132
    %v265 = vunpack.c.h.b16 %v132
    %v266 = vunpack.c.l.b16 %v133
    %v267 = vunpack.c.h.b16 %v133
    %v268 = vunpack.c.l.b16 %v134
    %v269 = vunpack.c.h.b16 %v134
    %v270 = vunpack.c.l.b16 %v135
    %v271 = vunpack.c.h.b16 %v135
    %v272 = vunpack.c.l.b16 %v136
    %v273 = vunpack.c.h.b16 %v136
    %v274 = vunpack.c.l.b16 %v137
    %v275 = vunpack.c.h.b16 %v137
    %v276 = vunpack.c.l.b16 %v138
    %v277 = vunpack.c.h.b16 %v138
    %v278 = vunpack.c.l.b16 %v139
    %v279 = vunpack.c.h.b16 %v139
    %v280 = vunpack.c.l.b16 %v140
    %v281 = vunpack.c.h.b16 %v140
    %v282 = vunpack.c.l.b16 %v141
    %v283 = vunpack.c.h.b16 %v141
    %v284 = vunpack.c.l.b16 %v142
    %v285 = vunpack.c.h.b16 %v142
    %v286 = vunpack.c.l.b16 %v143
    %v287 = vunpack.c.h.b16 %v143
    %v288 = vunpack.c.l.b16 %v144
    %v289 = vunpack.c.h.b16 %v144
    %v290 = vunpack.c.l.b16 %v145
    %v291 = vunpack.c.h.b16 %v145
    %v292 = vunpack.c.l.b16 %v146
    %v293 = vunpack.c.h.b16 %v146
    %v294 = vunpack.c.l.b16 %v147
    %v295 = vunpack.c.h.b16 %v147
    %v296 = vunpack.c.l.b16 %v148
    %v297 = vunpack.c.h.b16 %v148
    %v298 = vunpack.c.l.b16 %v149
    %v299 = vunpack.c.h.b16 %v149
    %v300 = vunpack.c.l.b16 %v150
    %v301 = vunpack.c.h.b16 %v150
    %v302 = vunpack.c.l.b16 %v151
    %v303 = vunpack.c.h.b16 %v151
    %v304 = vunpack.c.l.b16 %v152
    %v305 = vunpack.c.h.b16 %v152
    %v306 = vunpack.c.l.b16 %v153
    %v307 = vunpack.c.h.b16 %v153
    %v308 = vunpack.c.l.b16 %v154
    %v309 = vunpack.c.h.b16 %v154
    %v310 = vunpack.c.l.b16 %v155
    %v311 = vunpack.c.h.b16 %v155
    %v312 = vunpack.c.l.b16 %v156
    %v313 = vunpack.c.h.b16 %v156
    %v314 = vunpack.c.l.b16 %v157
    %v315 = vunpack.c.h.b16 %v157
    %v316 = vunpack.c.l.b16 %v158
    %v317 = vunpack.c.h.b16 %v158
    %v318 = vunpack.c.l.b16 %v159
    %v319 = vunpack.c.h.b16 %v159
    %v320 = vunpack.c.l.b16 %v160
    %v321 = vunpack.c.h.b16 %v160
    %v322 = vunpack.c.l.b16 %v161
    %v323 = vunpack.c.h.b16 %v161
    %v324 = vunpack.c.l.b16 %v162
    %v325 = vunpack.c.h.b16 %v162
    %v326 = vunpack.c.l.b16 %v163
    %v327 = vunpack.c.h.b16 %v163
    %v328 = vunpack.c.l.b16 %v164
    %v329 = vunpack.c.h.b16 %v164
    %v330 = vunpack.c.l.b16 %v165
    %v331 = vunpack.c.h.b16 %v165
    %v332 = vunpack.c.l.b16 %v166
    %v333 = vunpack.c.h.b16 %v166
    %v334 = vunpack.c.l.b16 %v167
    %v335 = vunpack.c.h.b16 %v167
    %v336 = vunpack.c.l.b16 %v168
    %v337 = vunpack.c.h.b16 %v168
    %v338 = vunpack.c.l.b16 %v169
    %v339 = vunpack.c.h.b16 %v169
    %v340 = vunpack.c.l.b16 %v170
    %v341 = vunpack.c.h.b16 %v170
    %v342 = vunpack.c.l.b16 %v171
    %v343 = vunpack.c.h.b16 %v171
    %v344 = vunpack.c.l.b16 %v172
    %v345 = vunpack.c.h.b16 %v172
    %v346 = vunpack.c.l.b16 %v173
    %v347 = vunpack.c.h.b16 %v173
    %v348 = vunpack.c.l.b16 %v174
    %v349 = vunpack.c.h.b16 %v174
    %v350 = vunpack.c.l.b16 %v175
    %v351 = vunpack.c.h.b16 %v175
    %v352 = vunpack.c.l.b16 %v176
    %v353 = vunpack.c.h.b16 %v176
    %v354 = vunpack.c.l.b16 %v177
    %v355 = vunpack.c.h.b16 %v177
    %v356 = vunpack.c.l.b16 %v178
    %v357 = vunpack.c.h.b16 %v178
    %v358 = vunpack.c.l.b16 %v179
    %v359 = vunpack.c.h.b16 %v179
    %v360 = vunpack.c.l.b16 %v180
    %v361 = vunpack.c.h.b16 %v180
    %v362 = vunpack.c.l.b16 %v181
    %v363 = vunpack.c.h.b16 %v181
    %v364 = vunpack.c.l.b16 %v182
    %v365 = vunpack.c.h.b16 %v182
    %v366 = vunpack.c.l.b16 %v183
    %v367 = vunpack.c.h.b16 %v183
    %v368 = vunpack.c.l.b16 %v184
    %v369 = vunpack.c.h.b16 %v184
    %v370 = vunpack.c.l.b16 %v185
    %v371 = vunpack.c.h.b16 %v185
    %v372 = vunpack.c.l.b16 %v186
    %v373 = vunpack.c.h.b16 %v186
    %v374 = vunpack.c.l.b16 %v187
    %v375 = vunpack.c.h.b16 %v187
    %v376 = vunpack.c.l.b16 %v188
    %v377 = vunpack.c.h.b16 %v188
    %v378 = vunpack.c.l.b16 %v189
    %v379 = vunpack.c.h.b16 %v189
    %v380 = vunpack.c.l.b16 %v190
    %v381 = vunpack.c.h.b16 %v190
    %v382 = vunpack.c.l.b16 %v191
    %v383 = vunpack.c.h.b16 %v191
    %v384 = vunpack.c.l.b16 %v192
    %v385 = vunpack.c.h.b16 %v192
    %v386 = vunpack.c.l.b16 %v193
    %v387 = vunpack.c.h.b16 %v193
    %v388 = vpack.c.b16 %v262, %v260
    %v389 = vpack.c.b16 %v263, %v261
    %v390 = vpack.c.b16 %v266, %v264
    %v391 = vpack.c.b16 %v267, %v265
    %v392 = vpack.c.b16 %v270, %v268
    %v393 = vpack.c.b16 %v271, %v269
    %v394 = vpack.c.b16 %v274, %v272
    %v395 = vpack.c.b16 %v275, %v273
    %v396 = vpack.c.b16 %v278, %v276
    %v397 = vpack.c.b16 %v279, %v277
    %v398 = vpack.c.b16 %v282, %v280
    %v399 = vpack.c.b16 %v283, %v281
    %v400 = vpack.c.b16 %v286, %v284
    %v401 = vpack.c.b16 %v287, %v285
    %v402 = vpack.c.b16 %v290, %v288
    %v403 = vpack.c.b16 %v291, %v289
    %v404 = vpack.c.b16 %v294, %v292
    %v405 = vpack.c.b16 %v295, %v293
    %v406 = vpack.c.b16 %v298, %v296
    %v407 = vpack.c.b16 %v299, %v297
    %v408 = vpack.c.b16 %v302, %v300
    %v409 = vpack.c.b16 %v303, %v301
    %v410 = vpack.c.b16 %v306, %v304
    %v411 = vpack.c.b16 %v307, %v305
    %v412 = vpack.c.b16 %v310, %v308
    %v413 = vpack.c.b16 %v311, %v309
    %v414 = vpack.c.b16 %v314, %v312
    %v415 = vpack.c.b16 %v315, %v313
    %v416 = vpack.c.b16 %v318, %v316
    %v417 = vpack.c.b16 %v319, %v317
    %v418 = vpack.c.b16 %v322, %v320
    %v419 = vpack.c.b16 %v323, %v321
    %v420 = vpack.c.b16 %v326, %v324
    %v421 = vpack.c.b16 %v327, %v325
    %v422 = vpack.c.b16 %v330, %v328
    %v423 = vpack.c.b16 %v331, %v329
    %v424 = vpack.c.b16 %v334, %v332
    %v425 = vpack.c.b16 %v335, %v333
    %v426 = vpack.c.b16 %v338, %v336
    %v427 = vpack.c.b16 %v339, %v337
    %v428 = vpack.c.b16 %v342, %v340
    %v429 = vpack.c.b16 %v343, %v341
    %v430 = vpack.c.b16 %v346, %v344
    %v431 = vpack.c.b16 %v347, %v345
    %v432 = vpack.c.b16 %v350, %v348
    %v433 = vpack.c.b16 %v351, %v349
    %v434 = vpack.c.b16 %v354, %v352
    %v435 = vpack.c.b16 %v355, %v353
    %v436 = vpack.c.b16 %v358, %v356
    %v437 = vpack.c.b16 %v359, %v357
    %v438 = vpack.c.b16 %v362, %v360
    %v439 = vpack.c.b16 %v363, %v361
    %v440 = vpack.c.b16 %v366, %v364
    %v441 = vpack.c.b16 %v367, %v365
    %v442 = vpack.c.b16 %v370, %v368
    %v443 = vpack.c.b16 %v371, %v369
    %v444 = vpack.c.b16 %v374, %v372
    %v445 = vpack.c.b16 %v375, %v373
    %v446 = vpack.c.b16 %v378, %v376
    %v447 = vpack.c.b16 %v379, %v377
    %v448 = vpack.c.b16 %v382, %v380
    %v449 = vpack.c.b16 %v383, %v381
    %v450 = vpack.c.b16 %v386, %v384
    %v451 = vpack.c.b16 %v387, %v385
    %516 = vmatprep.subr.bf16.mxu0 %v389
    %517 = vmatpush1.bf16.msra.mxu0 %v388
    %518 = vmatprep.subr.bf16.mxu0 %v391
    %519 = vmatpush1.bf16.msra.mxu0 %v390
    %520 = vmatprep.subr.bf16.mxu0 %v393
    %521 = vmatpush1.bf16.msra.mxu0 %v392
    %522 = vmatprep.subr.bf16.mxu0 %v395
    %523 = vmatpush1.bf16.msra.mxu0 %v394
    %524 = vmatprep.subr.bf16.mxu0 %v397
    %525 = vmatpush1.bf16.msra.mxu0 %v396
    %526 = vmatprep.subr.bf16.mxu0 %v399
    %527 = vmatpush1.bf16.msra.mxu0 %v398
    %528 = vmatprep.subr.bf16.mxu0 %v401
    %529 = vmatpush1.bf16.msra.mxu0 %v400
    %530 = vmatprep.subr.bf16.mxu0 %v403
    %531 = vmatpush1.bf16.msra.mxu0 %v402
    %532 = vmatprep.subr.bf16.mxu0 %v405
    %533 = vmatpush1.bf16.msra.mxu0 %v404
    %534 = vmatprep.subr.bf16.mxu0 %v407
    %535 = vmatpush1.bf16.msra.mxu0 %v406
    %536 = vmatprep.subr.bf16.mxu0 %v409
    %537 = vmatpush1.bf16.msra.mxu0 %v408
    %538 = vmatprep.subr.bf16.mxu0 %v411
    %539 = vmatpush1.bf16.msra.mxu0 %v410
    %540 = vmatprep.subr.bf16.mxu0 %v413
    %541 = vmatpush1.bf16.msra.mxu0 %v412
    %542 = vmatprep.subr.bf16.mxu0 %v415
    %543 = vmatpush1.bf16.msra.mxu0 %v414
    %544 = vmatprep.subr.bf16.mxu0 %v417
    %545 = vmatpush1.bf16.msra.mxu0 %v416
    %546 = vmatprep.subr.bf16.mxu0 %v419
    %547 = vmatpush1.bf16.msra.mxu0 %v418
    %548 = vmatprep.mubr.bf16.mxu0 %v127
    %549 = vmatmul.mubr.bf16.gmra.mrb[0].mxu0 %v126
    %v550 = vpop.f32.mrb[0].mxu0
    %v551 = vadd.f32 %v195, %v550
    %v552 = vpop.f32.mrb[0].mxu0
    %v553 = vadd.f32 %v195, %v552
    %v554 = vpop.f32.mrb[0].mxu0
    %v555 = vpop.f32.mrb[0].mxu0
    %556 = vdwg.mxu0
    %557 = vmatprep.subr.bf16.mxu0 %v421
    %558 = vmatpush1.bf16.msra.mxu0 %v420
    %559 = vmatprep.subr.bf16.mxu0 %v423
    %560 = vmatpush1.bf16.msra.mxu0 %v422
    %561 = vmatprep.subr.bf16.mxu0 %v425
    %562 = vmatpush1.bf16.msra.mxu0 %v424
    %563 = vmatprep.subr.bf16.mxu0 %v427
    %564 = vmatpush1.bf16.msra.mxu0 %v426
    %565 = vmatprep.subr.bf16.mxu0 %v429
    %566 = vmatpush1.bf16.msra.mxu0 %v428
    %567 = vmatprep.subr.bf16.mxu0 %v431
    %568 = vmatpush1.bf16.msra.mxu0 %v430
    %569 = vmatprep.subr.bf16.mxu0 %v433
    %570 = vmatpush1.bf16.msra.mxu0 %v432
    %571 = vmatprep.subr.bf16.mxu0 %v435
    %572 = vmatpush1.bf16.msra.mxu0 %v434
    %573 = vmatprep.subr.bf16.mxu0 %v437
    %574 = vmatpush1.bf16.msra.mxu0 %v436
    %575 = vmatprep.subr.bf16.mxu0 %v439
    %576 = vmatpush1.bf16.msra.mxu0 %v438
    %577 = vmatprep.subr.bf16.mxu0 %v441
    %578 = vmatpush1.bf16.msra.mxu0 %v440
    %579 = vmatprep.subr.bf16.mxu0 %v443
    %580 = vmatpush1.bf16.msra.mxu0 %v442
    %581 = vmatprep.subr.bf16.mxu0 %v445
    %582 = vmatpush1.bf16.msra.mxu0 %v444
    %583 = vmatprep.subr.bf16.mxu0 %v447
    %584 = vmatpush1.bf16.msra.mxu0 %v446
    %585 = vmatprep.subr.bf16.mxu0 %v449
    %586 = vmatpush1.bf16.msra.mxu0 %v448
    %587 = vmatprep.subr.bf16.mxu0 %v451
    %588 = vmatpush1.bf16.msra.mxu0 %v450
    %589 = vmatprep.mubr.bf16.mxu0 %v129
    %590 = vmatmul.mubr.bf16.gmra.mrb[0].mxu0 %v128
    %v591 = vpop.f32.mrb[0].mxu0
    %v592 = vadd.f32 %v551, %v591
    %v593 = vpop.f32.mrb[0].mxu0
    %v594 = vadd.f32 %v553, %v593
    %v595 = vpop.f32.mrb[0].mxu0
    %v596 = vpop.f32.mrb[0].mxu0
    %597 = vdwg.mxu0
    %v598 = vxor.u32 %v592, 2147483648
    %v599 = vxor.u32 %v594, 2147483648
    %v600 = vmul.f32 %v598, 1.442695
    %v601 = vpow.pop %v600
    %v602 = vmul.f32 %v599, 1.442695
    %v603 = vpow.pop %v602
    %v604 = vadd.f32 %v601, 1.0
    %v605 = vadd.f32 %v603, 1.0
    %v606 = vrcp.pop %v604
    %v607 = vmul.f32 1.0, %v606
    %v608 = vrcp.pop %v605
    %v609 = vmul.f32 1.0, %v608
    %v612 = vcombine.low %v607, %v609
    %v614 = vunpack.c.l.s4 1983009808
    %v615 = vunpack.c.0.s8 %v614
    %v616 = vlaneseq
    %v617 = vshrl.u32 %v616, 7
    %v618 = vsub.s32 %v615, %v617
    %v619 = vrot.slane %v612, %v618
    %621 = vst [vmem:[#allocation8] sm:$0xf] %v619
    // Predicated region
    $region22: #{tpu_custom_call.1} parent=1 // pred_check
      _
    $region23: #{tpu_custom_call.1} parent=1 // pred_check_branch
      %623 = sbr.rel (0) target = $region25
    $region24: #{tpu_custom_call.1} parent=1 // pred_region
      %s625 = ssub.s32 64, 64
      %626 = vsyncadd [#allocation5], %s625
      %s628 = sshll.u32 [#allocation8], 4
      %s629 = int_to_ptr.vmem [resolvable:$true] %s628
      %631 = dma.vmem_to_hbm [thread:$0]  %s629, 64, %s3, [#allocation5]
    $region25: #{tpu_custom_call.1} parent=1 // pred_fallthru
      _
    // Predicated region
    $region26: #{tpu_custom_call.1} parent=1 // pred_check
      _
    $region27: #{tpu_custom_call.1} parent=1 // pred_check_branch
      %633 = sbr.rel (0) target = $region29
    $region28: #{tpu_custom_call.1} parent=1 // pred_region
      %634 = dma.done [#allocation5], 64
    $region29: #{tpu_custom_call.1} parent=1 // pred_fallthru
      _
    %635 = vsyncpa [#allocation4], 1
    %636 = vsyncpa [#allocation7], 1
    %637 = vsyncpa [#allocation5], 1

// kernel: tpu_custom_call.1
$region0: #{tpu_custom_call.1}
  #allocation0 [shape = 'u32[]', space=smem, size = 0x4, offset = 0x4, fixed_abs, tag = 'smem constant byte address 0x4 - core index']
  #allocation1 [shape = 'u32[144,128]{1,0:T(1,128)}', space=vmem, size = 0x12000, scoped, tag = 'internal scratch']
  #allocation2 [shape = 'f32[1]{0:T(128)S(6)}', space=smem, size = 0x200, scoped, tag = 'scoped memory for tpu_custom_call.1']
  %s0 = inlined_call_operand.hbm [shape: f32[2,4,256], index: 0, kind: input, shape index: {}]
  %s1 = inlined_call_operand.hbm [shape: bf16[512,256], index: 1, kind: input, shape index: {}]
  %s2 = inlined_call_operand.<no memory space> [shape: f32[1], index: 2, kind: input, shape index: {}]
  %s3 = inlined_call_operand.hbm [shape: f32[2,256], index: 3, kind: output, shape index: {}]
  %s4 = sld [smem:[#allocation0]]
  $region30: #{tpu_custom_call.1} parent=0
    _
  %s6 = ssub.s32 1, %s4
  %s7 = scalar_select 0, %s6, %s4
  %8 = sst [smem:[#allocation2]] %s2
  $region1: #{tpu_custom_call.1} parent=0
    #allocation3 [shape = 'u8[8192]{0}', space=vmem, size = 0x2000, scoped, tag = 'input window, operand 0, single buffered']
    #allocation4 [shape = 's32[1]{0}', space=sflag, size = 0x4, scoped, tag = 'scoped memory for tpu_custom_call.1']
    #allocation5 [shape = 's32[1]{0}', space=sflag, size = 0x4, scoped, tag = 'scoped memory for tpu_custom_call.1']
    #allocation6 [shape = 'u8[262144]{0}', space=vmem, size = 0x40000, scoped, tag = 'input window, operand 1, single buffered']
    #allocation7 [shape = 's32[1]{0}', space=sflag, size = 0x4, scoped, tag = 'scoped memory for tpu_custom_call.1']
    #allocation8 [shape = 'u8[2048]{0}', space=vmem, size = 0x800, scoped, tag = 'output window, operand 0, single buffered']
    %9 = vsyncpa [#allocation4], 0
    %10 = vsyncpa [#allocation7], 0
    %11 = vsyncpa [#allocation5], 0
    // Predicated region
    $region2: #{tpu_custom_call.1} parent=1 // pred_check
      _
    $region3: #{tpu_custom_call.1} parent=1 // pred_check_branch
      %13 = sbr.rel (0) target = $region5
    $region4: #{tpu_custom_call.1} parent=1 // pred_region
      %s15 = ssub.s32 256, 256
      %16 = vsyncadd [#allocation4], %s15
      %s17 = sshll.u32 [#allocation3], 4
      %s18 = int_to_ptr.vmem [resolvable:$true] %s17
      %23 = dma.hbm_to_vmem [thread:$0]  %s0, 256, %s18, [#allocation4], 128, 128, 8
    $region5: #{tpu_custom_call.1} parent=1 // pred_fallthru
      _
    // Predicated region
    $region6: #{tpu_custom_call.1} parent=1 // pred_check
      _
    $region7: #{tpu_custom_call.1} parent=1 // pred_check_branch
      %25 = sbr.rel (0) target = $region9
    $region8: #{tpu_custom_call.1} parent=1 // pred_region
      %s27 = ssub.s32 8192, 8192
      %28 = vsyncadd [#allocation7], %s27
      %s29 = sshll.u32 [#allocation6], 4
      %s30 = int_to_ptr.vmem [resolvable:$true] %s29
      %35 = dma.hbm_to_vmem [thread:$0]  %s1, 8192, %s30, [#allocation7], 128, 128, 8
    $region9: #{tpu_custom_call.1} parent=1 // pred_fallthru
      _
    // Predicated region
    $region10: #{tpu_custom_call.1} parent=1 // pred_check
      _
    $region11: #{tpu_custom_call.1} parent=1 // pred_check_branch
      %37 = sbr.rel (0) target = $region13
    $region12: #{tpu_custom_call.1} parent=1 // pred_region
      _
    $region13: #{tpu_custom_call.1} parent=1 // pred_fallthru
      _
    // Predicated region
    $region14: #{tpu_custom_call.1} parent=1 // pred_check
      _
    $region15: #{tpu_custom_call.1} parent=1 // pred_check_branch
      %39 = sbr.rel (0) target = $region17
    $region16: #{tpu_custom_call.1} parent=1 // pred_region
      %40 = dma.done [#allocation4], 256
    $region17: #{tpu_custom_call.1} parent=1 // pred_fallthru
      _
    // Predicated region
    $region18: #{tpu_custom_call.1} parent=1 // pred_check
      _
    $region19: #{tpu_custom_call.1} parent=1 // pred_check_branch
      %42 = sbr.rel (0) target = $region21
    $region20: #{tpu_custom_call.1} parent=1 // pred_region
      %43 = dma.done [#allocation7], 8192
    $region21: #{tpu_custom_call.1} parent=1 // pred_fallthru
      _
    %v44 = vld [vmem:[#allocation3] sm:$0xff]
    %v45 = vld [vmem:[#allocation3 + $0x8] sm:$0xff]
    %v48 = vcombine.high %v44, %v44
    %v49 = vcombine.high %v45, %v45
    %vm52 = vcmask 1043456
    %v53 = vsel %vm52, %v44, 0.0
    %v54 = vrot.slane %v53, 4
    %v55 = vadd.f32 %v53, %v54
    %v56 = vrot.slane %v55, 2
    %v57 = vadd.f32 %v55, %v56
    %v58 = vrot.slane %v57, 1
    %v59 = vadd.f32 %v57, %v58
    %v60 = vsel %vm52, %v48, 0.0
    %v61 = vrot.slane %v60, 4
    %v62 = vadd.f32 %v60, %v61
    %v63 = vrot.slane %v62, 2
    %v64 = vadd.f32 %v62, %v63
    %v65 = vrot.slane %v64, 1
    %v66 = vadd.f32 %v64, %v65
    %v67 = vsel %vm52, %v45, 0.0
    %v68 = vrot.slane %v67, 4
    %v69 = vadd.f32 %v67, %v68
    %v70 = vrot.slane %v69, 2
    %v71 = vadd.f32 %v69, %v70
    %v72 = vrot.slane %v71, 1
    %v73 = vadd.f32 %v71, %v72
    %v74 = vsel %vm52, %v49, 0.0
    %v75 = vrot.slane %v74, 4
    %v76 = vadd.f32 %v74, %v75
    %v77 = vrot.slane %v76, 2
    %v78 = vadd.f32 %v76, %v77
    %v79 = vrot.slane %v78, 1
    %v80 = vadd.f32 %v78, %v79
    %v81 = vsel %vm52, %v44, -inf
    %v82 = vrot.slane %v81, 4
    %v83 = vmax.f32 %v81, %v82
    %v84 = vrot.slane %v83, 2
    %v85 = vmax.f32 %v83, %v84
    %v86 = vrot.slane %v85, 1
    %v87 = vmax.f32 %v85, %v86
    %v88 = vsel %vm52, %v48, -inf
    %v89 = vrot.slane %v88, 4
    %v90 = vmax.f32 %v88, %v89
    %v91 = vrot.slane %v90, 2
    %v92 = vmax.f32 %v90, %v91
    %v93 = vrot.slane %v92, 1
    %v94 = vmax.f32 %v92, %v93
    %v95 = vsel %vm52, %v45, -inf
    %v96 = vrot.slane %v95, 4
    %v97 = vmax.f32 %v95, %v96
    %v98 = vrot.slane %v97, 2
    %v99 = vmax.f32 %v97, %v98
    %v100 = vrot.slane %v99, 1
    %v101 = vmax.f32 %v99, %v100
    %v102 = vsel %vm52, %v49, -inf
    %v103 = vrot.slane %v102, 4
    %v104 = vmax.f32 %v102, %v103
    %v105 = vrot.slane %v104, 2
    %v106 = vmax.f32 %v104, %v105
    %v107 = vrot.slane %v106, 1
    %v108 = vmax.f32 %v106, %v107
    %vm113 = vcmask 1041409
    %v114 = vsel %vm113, %v73, %v59
    %v115 = vsel %vm113, %v80, %v66
    %v122 = vsel %vm113, %v101, %v87
    %v123 = vsel %vm113, %v108, %v94
    %v126 = vpack.c.bf16 %v114, %v114
    %v127 = vpack.c.bf16 %v115, %v115
    %v128 = vpack.c.bf16 %v122, %v122
    %v129 = vpack.c.bf16 %v123, %v123
    %v130 = vld [vmem:[#allocation6] sm:$0xff]
    %v131 = vld [vmem:[#allocation6 + $0x8] sm:$0xff]
    %v132 = vld [vmem:[#allocation6 + $0x10] sm:$0xff]
    %v133 = vld [vmem:[#allocation6 + $0x18] sm:$0xff]
    %v134 = vld [vmem:[#allocation6 + $0x20] sm:$0xff]
    %v135 = vld [vmem:[#allocation6 + $0x28] sm:$0xff]
    %v136 = vld [vmem:[#allocation6 + $0x30] sm:$0xff]
    %v137 = vld [vmem:[#allocation6 + $0x38] sm:$0xff]
    %v138 = vld [vmem:[#allocation6 + $0x40] sm:$0xff]
    %v139 = vld [vmem:[#allocation6 + $0x48] sm:$0xff]
    %v140 = vld [vmem:[#allocation6 + $0x50] sm:$0xff]
    %v141 = vld [vmem:[#allocation6 + $0x58] sm:$0xff]
    %v142 = vld [vmem:[#allocation6 + $0x60] sm:$0xff]
    %v143 = vld [vmem:[#allocation6 + $0x68] sm:$0xff]
    %v144 = vld [vmem:[#allocation6 + $0x70] sm:$0xff]
    %v145 = vld [vmem:[#allocation6 + $0x78] sm:$0xff]
    %v146 = vld [vmem:[#allocation6 + $0x80] sm:$0xff]
    %v147 = vld [vmem:[#allocation6 + $0x88] sm:$0xff]
    %v148 = vld [vmem:[#allocation6 + $0x90] sm:$0xff]
    %v149 = vld [vmem:[#allocation6 + $0x98] sm:$0xff]
    %v150 = vld [vmem:[#allocation6 + $0xa0] sm:$0xff]
    %v151 = vld [vmem:[#allocation6 + $0xa8] sm:$0xff]
    %v152 = vld [vmem:[#allocation6 + $0xb0] sm:$0xff]
    %v153 = vld [vmem:[#allocation6 + $0xb8] sm:$0xff]
    %v154 = vld [vmem:[#allocation6 + $0xc0] sm:$0xff]
    %v155 = vld [vmem:[#allocation6 + $0xc8] sm:$0xff]
    %v156 = vld [vmem:[#allocation6 + $0xd0] sm:$0xff]
    %v157 = vld [vmem:[#allocation6 + $0xd8] sm:$0xff]
    %v158 = vld [vmem:[#allocation6 + $0xe0] sm:$0xff]
    %v159 = vld [vmem:[#allocation6 + $0xe8] sm:$0xff]
    %v160 = vld [vmem:[#allocation6 + $0xf0] sm:$0xff]
    %v161 = vld [vmem:[#allocation6 + $0xf8] sm:$0xff]
    %v162 = vld [vmem:[#allocation6 + $0x100] sm:$0xff]
    %v163 = vld [vmem:[#allocation6 + $0x108] sm:$0xff]
    %v164 = vld [vmem:[#allocation6 + $0x110] sm:$0xff]
    %v165 = vld [vmem:[#allocation6 + $0x118] sm:$0xff]
    %v166 = vld [vmem:[#allocation6 + $0x120] sm:$0xff]
    %v167 = vld [vmem:[#allocation6 + $0x128] sm:$0xff]
    %v168 = vld [vmem:[#allocation6 + $0x130] sm:$0xff]
    %v169 = vld [vmem:[#allocation6 + $0x138] sm:$0xff]
    %v170 = vld [vmem:[#allocation6 + $0x140] sm:$0xff]
    %v171 = vld [vmem:[#allocation6 + $0x148] sm:$0xff]
    %v172 = vld [vmem:[#allocation6 + $0x150] sm:$0xff]
    %v173 = vld [vmem:[#allocation6 + $0x158] sm:$0xff]
    %v174 = vld [vmem:[#allocation6 + $0x160] sm:$0xff]
    %v175 = vld [vmem:[#allocation6 + $0x168] sm:$0xff]
    %v176 = vld [vmem:[#allocation6 + $0x170] sm:$0xff]
    %v177 = vld [vmem:[#allocation6 + $0x178] sm:$0xff]
    %v178 = vld [vmem:[#allocation6 + $0x180] sm:$0xff]
    %v179 = vld [vmem:[#allocation6 + $0x188] sm:$0xff]
    %v180 = vld [vmem:[#allocation6 + $0x190] sm:$0xff]
    %v181 = vld [vmem:[#allocation6 + $0x198] sm:$0xff]
    %v182 = vld [vmem:[#allocation6 + $0x1a0] sm:$0xff]
    %v183 = vld [vmem:[#allocation6 + $0x1a8] sm:$0xff]
    %v184 = vld [vmem:[#allocation6 + $0x1b0] sm:$0xff]
    %v185 = vld [vmem:[#allocation6 + $0x1b8] sm:$0xff]
    %v186 = vld [vmem:[#allocation6 + $0x1c0] sm:$0xff]
    %v187 = vld [vmem:[#allocation6 + $0x1c8] sm:$0xff]
    %v188 = vld [vmem:[#allocation6 + $0x1d0] sm:$0xff]
    %v189 = vld [vmem:[#allocation6 + $0x1d8] sm:$0xff]
    %v190 = vld [vmem:[#allocation6 + $0x1e0] sm:$0xff]
    %v191 = vld [vmem:[#allocation6 + $0x1e8] sm:$0xff]
    %v192 = vld [vmem:[#allocation6 + $0x1f0] sm:$0xff]
    %v193 = vld [vmem:[#allocation6 + $0x1f8] sm:$0xff]
    %s194 = sld [smem:[#allocation2]]
    %v195 = vstv %s194
    %v260 = vunpack.c.l.b16 %v130
    %v261 = vunpack.c.h.b16 %v130
    %v262 = vunpack.c.l.b16 %v131
    %v263 = vunpack.c.h.b16 %v131
    %v264 = vunpack.c.l.b16 %v132
    %v265 = vunpack.c.h.b16 %v132
    %v266 = vunpack.c.l.b16 %v133
    %v267 = vunpack.c.h.b16 %v133
    %v268 = vunpack.c.l.b16 %v134
    %v269 = vunpack.c.h.b16 %v134
    %v270 = vunpack.c.l.b16 %v135
    %v271 = vunpack.c.h.b16 %v135
    %v272 = vunpack.c.l.b16 %v136
    %v273 = vunpack.c.h.b16 %v136
    %v274 = vunpack.c.l.b16 %v137
    %v275 = vunpack.c.h.b16 %v137
    %v276 = vunpack.c.l.b16 %v138
    %v277 = vunpack.c.h.b16 %v138
    %v278 = vunpack.c.l.b16 %v139
    %v279 = vunpack.c.h.b16 %v139
    %v280 = vunpack.c.l.b16 %v140
    %v281 = vunpack.c.h.b16 %v140
    %v282 = vunpack.c.l.b16 %v141
    %v283 = vunpack.c.h.b16 %v141
    %v284 = vunpack.c.l.b16 %v142
    %v285 = vunpack.c.h.b16 %v142
    %v286 = vunpack.c.l.b16 %v143
    %v287 = vunpack.c.h.b16 %v143
    %v288 = vunpack.c.l.b16 %v144
    %v289 = vunpack.c.h.b16 %v144
    %v290 = vunpack.c.l.b16 %v145
    %v291 = vunpack.c.h.b16 %v145
    %v292 = vunpack.c.l.b16 %v146
    %v293 = vunpack.c.h.b16 %v146
    %v294 = vunpack.c.l.b16 %v147
    %v295 = vunpack.c.h.b16 %v147
    %v296 = vunpack.c.l.b16 %v148
    %v297 = vunpack.c.h.b16 %v148
    %v298 = vunpack.c.l.b16 %v149
    %v299 = vunpack.c.h.b16 %v149
    %v300 = vunpack.c.l.b16 %v150
    %v301 = vunpack.c.h.b16 %v150
    %v302 = vunpack.c.l.b16 %v151
    %v303 = vunpack.c.h.b16 %v151
    %v304 = vunpack.c.l.b16 %v152
    %v305 = vunpack.c.h.b16 %v152
    %v306 = vunpack.c.l.b16 %v153
    %v307 = vunpack.c.h.b16 %v153
    %v308 = vunpack.c.l.b16 %v154
    %v309 = vunpack.c.h.b16 %v154
    %v310 = vunpack.c.l.b16 %v155
    %v311 = vunpack.c.h.b16 %v155
    %v312 = vunpack.c.l.b16 %v156
    %v313 = vunpack.c.h.b16 %v156
    %v314 = vunpack.c.l.b16 %v157
    %v315 = vunpack.c.h.b16 %v157
    %v316 = vunpack.c.l.b16 %v158
    %v317 = vunpack.c.h.b16 %v158
    %v318 = vunpack.c.l.b16 %v159
    %v319 = vunpack.c.h.b16 %v159
    %v320 = vunpack.c.l.b16 %v160
    %v321 = vunpack.c.h.b16 %v160
    %v322 = vunpack.c.l.b16 %v161
    %v323 = vunpack.c.h.b16 %v161
    %v324 = vunpack.c.l.b16 %v162
    %v325 = vunpack.c.h.b16 %v162
    %v326 = vunpack.c.l.b16 %v163
    %v327 = vunpack.c.h.b16 %v163
    %v328 = vunpack.c.l.b16 %v164
    %v329 = vunpack.c.h.b16 %v164
    %v330 = vunpack.c.l.b16 %v165
    %v331 = vunpack.c.h.b16 %v165
    %v332 = vunpack.c.l.b16 %v166
    %v333 = vunpack.c.h.b16 %v166
    %v334 = vunpack.c.l.b16 %v167
    %v335 = vunpack.c.h.b16 %v167
    %v336 = vunpack.c.l.b16 %v168
    %v337 = vunpack.c.h.b16 %v168
    %v338 = vunpack.c.l.b16 %v169
    %v339 = vunpack.c.h.b16 %v169
    %v340 = vunpack.c.l.b16 %v170
    %v341 = vunpack.c.h.b16 %v170
    %v342 = vunpack.c.l.b16 %v171
    %v343 = vunpack.c.h.b16 %v171
    %v344 = vunpack.c.l.b16 %v172
    %v345 = vunpack.c.h.b16 %v172
    %v346 = vunpack.c.l.b16 %v173
    %v347 = vunpack.c.h.b16 %v173
    %v348 = vunpack.c.l.b16 %v174
    %v349 = vunpack.c.h.b16 %v174
    %v350 = vunpack.c.l.b16 %v175
    %v351 = vunpack.c.h.b16 %v175
    %v352 = vunpack.c.l.b16 %v176
    %v353 = vunpack.c.h.b16 %v176
    %v354 = vunpack.c.l.b16 %v177
    %v355 = vunpack.c.h.b16 %v177
    %v356 = vunpack.c.l.b16 %v178
    %v357 = vunpack.c.h.b16 %v178
    %v358 = vunpack.c.l.b16 %v179
    %v359 = vunpack.c.h.b16 %v179
    %v360 = vunpack.c.l.b16 %v180
    %v361 = vunpack.c.h.b16 %v180
    %v362 = vunpack.c.l.b16 %v181
    %v363 = vunpack.c.h.b16 %v181
    %v364 = vunpack.c.l.b16 %v182
    %v365 = vunpack.c.h.b16 %v182
    %v366 = vunpack.c.l.b16 %v183
    %v367 = vunpack.c.h.b16 %v183
    %v368 = vunpack.c.l.b16 %v184
    %v369 = vunpack.c.h.b16 %v184
    %v370 = vunpack.c.l.b16 %v185
    %v371 = vunpack.c.h.b16 %v185
    %v372 = vunpack.c.l.b16 %v186
    %v373 = vunpack.c.h.b16 %v186
    %v374 = vunpack.c.l.b16 %v187
    %v375 = vunpack.c.h.b16 %v187
    %v376 = vunpack.c.l.b16 %v188
    %v377 = vunpack.c.h.b16 %v188
    %v378 = vunpack.c.l.b16 %v189
    %v379 = vunpack.c.h.b16 %v189
    %v380 = vunpack.c.l.b16 %v190
    %v381 = vunpack.c.h.b16 %v190
    %v382 = vunpack.c.l.b16 %v191
    %v383 = vunpack.c.h.b16 %v191
    %v384 = vunpack.c.l.b16 %v192
    %v385 = vunpack.c.h.b16 %v192
    %v386 = vunpack.c.l.b16 %v193
    %v387 = vunpack.c.h.b16 %v193
    %v388 = vpack.c.b16 %v262, %v260
    %v389 = vpack.c.b16 %v263, %v261
    %v390 = vpack.c.b16 %v266, %v264
    %v391 = vpack.c.b16 %v267, %v265
    %v392 = vpack.c.b16 %v270, %v268
    %v393 = vpack.c.b16 %v271, %v269
    %v394 = vpack.c.b16 %v274, %v272
    %v395 = vpack.c.b16 %v275, %v273
    %v396 = vpack.c.b16 %v278, %v276
    %v397 = vpack.c.b16 %v279, %v277
    %v398 = vpack.c.b16 %v282, %v280
    %v399 = vpack.c.b16 %v283, %v281
    %v400 = vpack.c.b16 %v286, %v284
    %v401 = vpack.c.b16 %v287, %v285
    %v402 = vpack.c.b16 %v290, %v288
    %v403 = vpack.c.b16 %v291, %v289
    %v404 = vpack.c.b16 %v294, %v292
    %v405 = vpack.c.b16 %v295, %v293
    %v406 = vpack.c.b16 %v298, %v296
    %v407 = vpack.c.b16 %v299, %v297
    %v408 = vpack.c.b16 %v302, %v300
    %v409 = vpack.c.b16 %v303, %v301
    %v410 = vpack.c.b16 %v306, %v304
    %v411 = vpack.c.b16 %v307, %v305
    %v412 = vpack.c.b16 %v310, %v308
    %v413 = vpack.c.b16 %v311, %v309
    %v414 = vpack.c.b16 %v314, %v312
    %v415 = vpack.c.b16 %v315, %v313
    %v416 = vpack.c.b16 %v318, %v316
    %v417 = vpack.c.b16 %v319, %v317
    %v418 = vpack.c.b16 %v322, %v320
    %v419 = vpack.c.b16 %v323, %v321
    %v420 = vpack.c.b16 %v326, %v324
    %v421 = vpack.c.b16 %v327, %v325
    %v422 = vpack.c.b16 %v330, %v328
    %v423 = vpack.c.b16 %v331, %v329
    %v424 = vpack.c.b16 %v334, %v332
    %v425 = vpack.c.b16 %v335, %v333
    %v426 = vpack.c.b16 %v338, %v336
    %v427 = vpack.c.b16 %v339, %v337
    %v428 = vpack.c.b16 %v342, %v340
    %v429 = vpack.c.b16 %v343, %v341
    %v430 = vpack.c.b16 %v346, %v344
    %v431 = vpack.c.b16 %v347, %v345
    %v432 = vpack.c.b16 %v350, %v348
    %v433 = vpack.c.b16 %v351, %v349
    %v434 = vpack.c.b16 %v354, %v352
    %v435 = vpack.c.b16 %v355, %v353
    %v436 = vpack.c.b16 %v358, %v356
    %v437 = vpack.c.b16 %v359, %v357
    %v438 = vpack.c.b16 %v362, %v360
    %v439 = vpack.c.b16 %v363, %v361
    %v440 = vpack.c.b16 %v366, %v364
    %v441 = vpack.c.b16 %v367, %v365
    %v442 = vpack.c.b16 %v370, %v368
    %v443 = vpack.c.b16 %v371, %v369
    %v444 = vpack.c.b16 %v374, %v372
    %v445 = vpack.c.b16 %v375, %v373
    %v446 = vpack.c.b16 %v378, %v376
    %v447 = vpack.c.b16 %v379, %v377
    %v448 = vpack.c.b16 %v382, %v380
    %v449 = vpack.c.b16 %v383, %v381
    %v450 = vpack.c.b16 %v386, %v384
    %v451 = vpack.c.b16 %v387, %v385
    %516 = vmatprep.subr.bf16.mxu0 %v389
    %517 = vmatpush1.bf16.msra.mxu0 %v388
    %518 = vmatprep.subr.bf16.mxu0 %v391
    %519 = vmatpush1.bf16.msra.mxu0 %v390
    %520 = vmatprep.subr.bf16.mxu0 %v393
    %521 = vmatpush1.bf16.msra.mxu0 %v392
    %522 = vmatprep.subr.bf16.mxu0 %v395
    %523 = vmatpush1.bf16.msra.mxu0 %v394
    %524 = vmatprep.subr.bf16.mxu0 %v397
    %525 = vmatpush1.bf16.msra.mxu0 %v396
    %526 = vmatprep.subr.bf16.mxu0 %v399
    %527 = vmatpush1.bf16.msra.mxu0 %v398
    %528 = vmatprep.subr.bf16.mxu0 %v401
    %529 = vmatpush1.bf16.msra.mxu0 %v400
    %530 = vmatprep.subr.bf16.mxu0 %v403
    %531 = vmatpush1.bf16.msra.mxu0 %v402
    %532 = vmatprep.subr.bf16.mxu0 %v405
    %533 = vmatpush1.bf16.msra.mxu0 %v404
    %534 = vmatprep.subr.bf16.mxu0 %v407
    %535 = vmatpush1.bf16.msra.mxu0 %v406
    %536 = vmatprep.subr.bf16.mxu0 %v409
    %537 = vmatpush1.bf16.msra.mxu0 %v408
    %538 = vmatprep.subr.bf16.mxu0 %v411
    %539 = vmatpush1.bf16.msra.mxu0 %v410
    %540 = vmatprep.subr.bf16.mxu0 %v413
    %541 = vmatpush1.bf16.msra.mxu0 %v412
    %542 = vmatprep.subr.bf16.mxu0 %v415
    %543 = vmatpush1.bf16.msra.mxu0 %v414
    %544 = vmatprep.subr.bf16.mxu0 %v417
    %545 = vmatpush1.bf16.msra.mxu0 %v416
    %546 = vmatprep.subr.bf16.mxu0 %v419
    %547 = vmatpush1.bf16.msra.mxu0 %v418
    %548 = vmatprep.mubr.bf16.mxu0 %v127
    %549 = vmatmul.mubr.bf16.gmra.mrb[0].mxu0 %v126
    %v550 = vpop.f32.mrb[0].mxu0
    %v551 = vadd.f32 %v195, %v550
    %v552 = vpop.f32.mrb[0].mxu0
    %v553 = vadd.f32 %v195, %v552
    %v554 = vpop.f32.mrb[0].mxu0
    %v555 = vpop.f32.mrb[0].mxu0
    %556 = vdwg.mxu0
    %557 = vmatprep.subr.bf16.mxu0 %v421
    %558 = vmatpush1.bf16.msra.mxu0 %v420
    %559 = vmatprep.subr.bf16.mxu0 %v423
    %560 = vmatpush1.bf16.msra.mxu0 %v422
    %561 = vmatprep.subr.bf16.mxu0 %v425
    %562 = vmatpush1.bf16.msra.mxu0 %v424
    %563 = vmatprep.subr.bf16.mxu0 %v427
    %564 = vmatpush1.bf16.msra.mxu0 %v426
    %565 = vmatprep.subr.bf16.mxu0 %v429
    %566 = vmatpush1.bf16.msra.mxu0 %v428
    %567 = vmatprep.subr.bf16.mxu0 %v431
    %568 = vmatpush1.bf16.msra.mxu0 %v430
    %569 = vmatprep.subr.bf16.mxu0 %v433
    %570 = vmatpush1.bf16.msra.mxu0 %v432
    %571 = vmatprep.subr.bf16.mxu0 %v435
    %572 = vmatpush1.bf16.msra.mxu0 %v434
    %573 = vmatprep.subr.bf16.mxu0 %v437
    %574 = vmatpush1.bf16.msra.mxu0 %v436
    %575 = vmatprep.subr.bf16.mxu0 %v439
    %576 = vmatpush1.bf16.msra.mxu0 %v438
    %577 = vmatprep.subr.bf16.mxu0 %v441
    %578 = vmatpush1.bf16.msra.mxu0 %v440
    %579 = vmatprep.subr.bf16.mxu0 %v443
    %580 = vmatpush1.bf16.msra.mxu0 %v442
    %581 = vmatprep.subr.bf16.mxu0 %v445
    %582 = vmatpush1.bf16.msra.mxu0 %v444
    %583 = vmatprep.subr.bf16.mxu0 %v447
    %584 = vmatpush1.bf16.msra.mxu0 %v446
    %585 = vmatprep.subr.bf16.mxu0 %v449
    %586 = vmatpush1.bf16.msra.mxu0 %v448
    %587 = vmatprep.subr.bf16.mxu0 %v451
    %588 = vmatpush1.bf16.msra.mxu0 %v450
    %589 = vmatprep.mubr.bf16.mxu0 %v129
    %590 = vmatmul.mubr.bf16.gmra.mrb[0].mxu0 %v128
    %v591 = vpop.f32.mrb[0].mxu0
    %v592 = vadd.f32 %v551, %v591
    %v593 = vpop.f32.mrb[0].mxu0
    %v594 = vadd.f32 %v553, %v593
    %v595 = vpop.f32.mrb[0].mxu0
    %v596 = vpop.f32.mrb[0].mxu0
    %597 = vdwg.mxu0
    %v598 = vxor.u32 %v592, 2147483648
    %v599 = vxor.u32 %v594, 2147483648
    %v600 = vmul.f32 %v598, 1.442695
    %v601 = vpow.pop %v600
    %v602 = vmul.f32 %v599, 1.442695
    %v603 = vpow.pop %v602
    %v604 = vadd.f32 %v601, 1.0
    %v605 = vadd.f32 %v603, 1.0
    %v606 = vrcp.pop %v604
    %v607 = vmul.f32 1.0, %v606
    %v608 = vrcp.pop %v605
    %v609 = vmul.f32 1.0, %v608
    %v612 = vcombine.low %v607, %v609
    %v614 = vunpack.c.l.s4 1983009808
    %v615 = vunpack.c.0.s8 %v614
    %v616 = vlaneseq
    %v617 = vshrl.u32 %v616, 7
    %v618 = vsub.s32 %v615, %v617
    %v619 = vrot.slane %v612, %v618
    %621 = vst [vmem:[#allocation8] sm:$0xf] %v619
    // Predicated region
    $region22: #{tpu_custom_call.1} parent=1 // pred_check
      _
    $region23: #{tpu_custom_call.1} parent=1 // pred_check_branch
      %623 = sbr.rel (0) target = $region25
    $region24: #{tpu_custom_call.1} parent=1 // pred_region
      %s625 = ssub.s32 64, 64
      %626 = vsyncadd [#allocation5], %s625
      %s628 = sshll.u32 [#allocation8], 4
      %s629 = int_to_ptr.vmem [resolvable:$true] %s628
      %631 = dma.vmem_to_hbm [thread:$0]  %s629, 64, %s3, [#allocation5]
    $region25: #{tpu_custom_call.1} parent=1 // pred_fallthru
      _
    // Predicated region
    $region26: #{tpu_custom_call.1} parent=1 // pred_check
      _
    $region27: #{tpu_custom_call.1} parent=1 // pred_check_branch
      %633 = sbr.rel (0) target = $region29
    $region28: #{tpu_custom_call.1} parent=1 // pred_region
      %634 = dma.done [#allocation5], 64
    $region29: #{tpu_custom_call.1} parent=1 // pred_fallthru
      _
    %635 = vsyncpa [#allocation4], 1
    %636 = vsyncpa [#allocation7], 1
    %637 = vsyncpa [#allocation5], 1

</llo_original>
